<compile_context>
chip_gen: v7x
topology: tpu7x:2x2x1
jax: 0.10.0
libtpu: 0.0.40
codegen_flags: <defaults>
</compile_context>

<pallas_src>
import jax
import jax.numpy as jnp
from jax.experimental import pallas as pl
from jax.experimental.pallas import tpu as pltpu

LANE = 128      # vreg lane width (last dim)
SUBLANE = 8     # vreg sublane width (second-to-last dim)


def _round_up(n, m):
    return ((n + m - 1) // m) * m


def _pad2d(a, rows, cols):
    pr, pc = rows - a.shape[0], cols - a.shape[1]
    if pr == 0 and pc == 0:
        return a
    return jnp.pad(a, ((0, pr), (0, pc)))


def dnn_kernel(x_ref, w1_ref, b1_ref, w2_ref, b2_ref, w3_ref, b3_ref, o_ref):
    """Fused MLP on one batch tile.

    x tile (tm, K1p) bf16; weights (Kp, Np) bf16 (VMEM-resident across grid);
    biases (1, Np) f32. Dots accumulate in f32 on the MXU; bias add / ReLU
    run in f32 on the VPU. All lane dims are multiples of 128.
    """
    # Layer 1: Linear + ReLU
    h1 = jnp.dot(x_ref[...], w1_ref[...], preferred_element_type=jnp.float32)
    h1 = jnp.maximum(h1 + b1_ref[...], 0.0)
    # Layer 2: Linear + ReLU
    h2 = jnp.dot(h1.astype(w2_ref.dtype), w2_ref[...],
                 preferred_element_type=jnp.float32)
    h2 = jnp.maximum(h2 + b2_ref[...], 0.0)
    # Output layer: Linear (no activation)
    out = jnp.dot(h2.astype(w3_ref.dtype), w3_ref[...],
                  preferred_element_type=jnp.float32)
    o_ref[...] = (out + b3_ref[...]).astype(o_ref.dtype)


def dnn_forward(x, w1, b1, w2, b2, w3, b3, *, max_block_batch=256):
    batch, in_f = x.shape
    h1_f, h2_f, out_f = w1.shape[1], w2.shape[1], w3.shape[1]

    # Lane-pad every feature dim to a multiple of 128 (lane-dense outputs).
    k1 = _round_up(in_f, LANE)
    n1 = _round_up(h1_f, LANE)
    n2 = _round_up(h2_f, LANE)
    n3 = _round_up(out_f, LANE)

    # Batch tile: multiple of 8 sublanes, capped so VMEM stays comfortable
    # even on v7x's 64 MiB (x/out tiles are double-buffered; weights resident).
    tm = min(max_block_batch, _round_up(batch, SUBLANE))
    bp = _round_up(batch, tm)

    compute_dtype = jnp.bfloat16  # native MXU format on v6e/v7x; f32 accumulate.

    xp = _pad2d(x, bp, k1).astype(compute_dtype)
    w1p = _pad2d(w1, k1, n1).astype(compute_dtype)
    w2p = _pad2d(w2, n1, n2).astype(compute_dtype)
    w3p = _pad2d(w3, n2, n3).astype(compute_dtype)
    b1p = _pad2d(b1, 1, n1).astype(jnp.float32)
    b2p = _pad2d(b2, 1, n2).astype(jnp.float32)
    b3p = _pad2d(b3, 1, n3).astype(jnp.float32)

    grid = (bp // tm,)

    # Constant index_map: block index never changes, so Pallas DMAs the
    # weights/biases once and keeps them resident in VMEM across grid steps.
    def const_map(i):
        return (0, 0)

    flops = 2 * bp * (k1 * n1 + n1 * n2 + n2 * n3)
    bytes_accessed = sum(int(a.size) * a.dtype.itemsize
                         for a in (xp, w1p, b1p, w2p, b2p, w3p, b3p))
    bytes_accessed += bp * n3 * 4  # f32 output

    out_padded = pl.pallas_call(
        dnn_kernel,
        out_shape=jax.ShapeDtypeStruct((bp, n3), jnp.float32),
        grid=grid,
        in_specs=[
            pl.BlockSpec((tm, k1), lambda i: (i, 0)),   # x: tiled over batch
            pl.BlockSpec((k1, n1), const_map),          # w1 (resident)
            pl.BlockSpec((1, n1), const_map),           # b1 (resident)
            pl.BlockSpec((n1, n2), const_map),          # w2 (resident)
            pl.BlockSpec((1, n2), const_map),           # b2 (resident)
            pl.BlockSpec((n2, n3), const_map),          # w3 (resident)
            pl.BlockSpec((1, n3), const_map),           # b3 (resident)
        ],
        out_specs=pl.BlockSpec((tm, n3), lambda i: (i, 0)),
        compiler_params=pltpu.CompilerParams(
            dimension_semantics=("parallel",),          # shard batch across TCs (v7x)
            vmem_limit_bytes=64 * 1024 * 1024,
        ),
        cost_estimate=pl.CostEstimate(
            flops=flops, transcendentals=0, bytes_accessed=bytes_accessed),
    )(xp, w1p, b1p, w2p, b2p, w3p, b3p)

    # Slice padded batch rows / lane-padded output columns back to logical shape.
    return out_padded[:batch, :out_f]


def init_linear_params(key, in_features, out_features):
    # Deterministic init mimicking PyTorch's nn.Linear uniform(-k, k), k=1/sqrt(in).
    kw, kb = jax.random.split(key)
    bound = 1.0 / jnp.sqrt(jnp.float32(in_features))
    w = jax.random.uniform(kw, (in_features, out_features), jnp.float32,
                           minval=-bound, maxval=bound)
    b = jax.random.uniform(kb, (1, out_features), jnp.float32,
                           minval=-bound, maxval=bound)
    return w, b


def reference_forward(x, w1, b1, w2, b2, w3, b3):
    # Mirrors the kernel's numerics: bf16 operands, f32 accumulation,
    # f32 bias add / ReLU.
    cd = jnp.bfloat16
    h1 = jnp.dot(x.astype(cd), w1.astype(cd),
                 preferred_element_type=jnp.float32) + b1
    h1 = jnp.maximum(h1, 0.0)
    h2 = jnp.dot(h1.astype(cd), w2.astype(cd),
                 preferred_element_type=jnp.float32) + b2
    h2 = jnp.maximum(h2, 0.0)
    return jnp.dot(h2.astype(cd), w3.astype(cd),
                   preferred_element_type=jnp.float32) + b3


if __name__ == "__main__":
    # Shapes consistent with DNN(input_size=32, hidden1_size=64,
    #                            hidden2_size=32, output_size=16), batch=8.
    batch, input_size, hidden1, hidden2, output_size = 8, 32, 64, 32, 16

    key = jax.random.PRNGKey(0)
    kx, k1, k2, k3 = jax.random.split(key, 4)

    x = jax.random.normal(kx, (batch, input_size), jnp.float32)
    w1, b1 = init_linear_params(k1, input_size, hidden1)
    w2, b2 = init_linear_params(k2, hidden1, hidden2)
    w3, b3 = init_linear_params(k3, hidden2, output_size)

    out = jax.block_until_ready(dnn_forward(x, w1, b1, w2, b2, w3, b3))

    ref = reference_forward(x, w1, b1, w2, b2, w3, b3)
    assert out.shape == (batch, output_size)
    assert jnp.allclose(out, ref, atol=1e-4, rtol=1e-4), (
        float(jnp.max(jnp.abs(out - ref))))

    print("KERNEL_OK")
</pallas_src>

<mosaic_0001>
module attributes {stable_mosaic.version = 11 : i64} {
  func.func @dnn_kernel(%arg0: i32, %arg1: memref<8x128xbf16, #tpu.memory_space<vmem>>, %arg2: memref<128x128xbf16, #tpu.memory_space<vmem>>, %arg3: memref<1x128xf32, #tpu.memory_space<vmem>>, %arg4: memref<128x128xbf16, #tpu.memory_space<vmem>>, %arg5: memref<1x128xf32, #tpu.memory_space<vmem>>, %arg6: memref<128x128xbf16, #tpu.memory_space<vmem>>, %arg7: memref<1x128xf32, #tpu.memory_space<vmem>>, %arg8: memref<8x128xf32, #tpu.memory_space<vmem>>) attributes {dimension_semantics = [#tpu.dimension_semantics<parallel>], iteration_bounds = array<i64: 1>, scalar_prefetch = 0 : i64, scratch_operands = 0 : i64, tpu.core_type = #tpu.core_type<tc>, window_params = [{transform_indices = @transform_0, window_bounds = array<i64: 8, 128>}, {pipeline_mode = #tpu.pipeline_mode<synchronous>, transform_indices = @transform_1, window_bounds = array<i64: 128, 128>}, {pipeline_mode = #tpu.pipeline_mode<synchronous>, transform_indices = @transform_2, window_bounds = array<i64: 1, 128>}, {pipeline_mode = #tpu.pipeline_mode<synchronous>, transform_indices = @transform_3, window_bounds = array<i64: 128, 128>}, {pipeline_mode = #tpu.pipeline_mode<synchronous>, transform_indices = @transform_4, window_bounds = array<i64: 1, 128>}, {pipeline_mode = #tpu.pipeline_mode<synchronous>, transform_indices = @transform_5, window_bounds = array<i64: 128, 128>}, {pipeline_mode = #tpu.pipeline_mode<synchronous>, transform_indices = @transform_6, window_bounds = array<i64: 1, 128>}, {transform_indices = @transform_7, window_bounds = array<i64: 8, 128>}]} {
    %c0 = arith.constant 0 : index
    %c0_0 = arith.constant 0 : index
    %0 = vector.load %arg1[%c0, %c0_0] : memref<8x128xbf16, #tpu.memory_space<vmem>>, vector<8x128xbf16>
    %c0_1 = arith.constant 0 : index
    %c0_2 = arith.constant 0 : index
    %1 = vector.load %arg2[%c0_1, %c0_2] : memref<128x128xbf16, #tpu.memory_space<vmem>>, vector<128x128xbf16>
    %cst = arith.constant dense<0.000000e+00> : vector<8x128xf32>
    %2 = tpu.matmul %0, %1, %cst {dimension_numbers = #tpu.dot_dimension_numbers<[1], [0], [0], [1], [0, 0, 1, 1], [], []>} : vector<8x128xbf16>, vector<128x128xbf16>, vector<8x128xf32> -> vector<8x128xf32>
    %c0_3 = arith.constant 0 : index
    %c0_4 = arith.constant 0 : index
    %3 = vector.load %arg3[%c0_3, %c0_4] : memref<1x128xf32, #tpu.memory_space<vmem>>, vector<1x128xf32>
    %4 = vector.broadcast %3 : vector<1x128xf32> to vector<8x128xf32>
    %5 = arith.addf %2, %4 : vector<8x128xf32>
    %cst_5 = arith.constant 0.000000e+00 : f32
    %6 = vector.broadcast %cst_5 : f32 to vector<8x128xf32>
    %7 = arith.maximumf %5, %6 : vector<8x128xf32>
    %8 = arith.truncf %7 : vector<8x128xf32> to vector<8x128xbf16>
    %c0_6 = arith.constant 0 : index
    %c0_7 = arith.constant 0 : index
    %9 = vector.load %arg4[%c0_6, %c0_7] : memref<128x128xbf16, #tpu.memory_space<vmem>>, vector<128x128xbf16>
    %cst_8 = arith.constant dense<0.000000e+00> : vector<8x128xf32>
    %10 = tpu.matmul %8, %9, %cst_8 {dimension_numbers = #tpu.dot_dimension_numbers<[1], [0], [0], [1], [0, 0, 1, 1], [], []>} : vector<8x128xbf16>, vector<128x128xbf16>, vector<8x128xf32> -> vector<8x128xf32>
    %c0_9 = arith.constant 0 : index
    %c0_10 = arith.constant 0 : index
    %11 = vector.load %arg5[%c0_9, %c0_10] : memref<1x128xf32, #tpu.memory_space<vmem>>, vector<1x128xf32>
    %12 = vector.broadcast %11 : vector<1x128xf32> to vector<8x128xf32>
    %13 = arith.addf %10, %12 : vector<8x128xf32>
    %cst_11 = arith.constant 0.000000e+00 : f32
    %14 = vector.broadcast %cst_11 : f32 to vector<8x128xf32>
    %15 = arith.maximumf %13, %14 : vector<8x128xf32>
    %16 = arith.truncf %15 : vector<8x128xf32> to vector<8x128xbf16>
    %c0_12 = arith.constant 0 : index
    %c0_13 = arith.constant 0 : index
    %17 = vector.load %arg6[%c0_12, %c0_13] : memref<128x128xbf16, #tpu.memory_space<vmem>>, vector<128x128xbf16>
    %cst_14 = arith.constant dense<0.000000e+00> : vector<8x128xf32>
    %18 = tpu.matmul %16, %17, %cst_14 {dimension_numbers = #tpu.dot_dimension_numbers<[1], [0], [0], [1], [0, 0, 1, 1], [], []>} : vector<8x128xbf16>, vector<128x128xbf16>, vector<8x128xf32> -> vector<8x128xf32>
    %c0_15 = arith.constant 0 : index
    %c0_16 = arith.constant 0 : index
    %19 = vector.load %arg7[%c0_15, %c0_16] : memref<1x128xf32, #tpu.memory_space<vmem>>, vector<1x128xf32>
    %20 = vector.broadcast %19 : vector<1x128xf32> to vector<8x128xf32>
    %21 = arith.addf %18, %20 : vector<8x128xf32>
    %c0_17 = arith.constant 0 : index
    %c0_18 = arith.constant 0 : index
    %22 = vector.load %arg8[%c0_17, %c0_18] : memref<8x128xf32, #tpu.memory_space<vmem>>, vector<8x128xf32>
    tpu.vector_store %arg8[%c0_17, %c0_18], %21 {strides = array<i32>} : memref<8x128xf32, #tpu.memory_space<vmem>>, vector<8x128xf32>,
    return
  }
  func.func @transform_0(%arg0: i32) -> (i32, i32) {
    %c0_i32 = arith.constant 0 : i32
    %c0_i32_0 = arith.constant 0 : i32
    return %arg0, %c0_i32 : i32, i32
  }
  func.func @transform_1(%arg0: i32) -> (i32, i32) {
    %c0_i32 = arith.constant 0 : i32
    %c0_i32_0 = arith.constant 0 : i32
    %c0_i32_1 = arith.constant 0 : i32
    return %c0_i32, %c0_i32_0 : i32, i32
  }
  func.func @transform_2(%arg0: i32) -> (i32, i32) {
    %c0_i32 = arith.constant 0 : i32
    %c0_i32_0 = arith.constant 0 : i32
    %c0_i32_1 = arith.constant 0 : i32
    return %c0_i32, %c0_i32_0 : i32, i32
  }
  func.func @transform_3(%arg0: i32) -> (i32, i32) {
    %c0_i32 = arith.constant 0 : i32
    %c0_i32_0 = arith.constant 0 : i32
    %c0_i32_1 = arith.constant 0 : i32
    return %c0_i32, %c0_i32_0 : i32, i32
  }
  func.func @transform_4(%arg0: i32) -> (i32, i32) {
    %c0_i32 = arith.constant 0 : i32
    %c0_i32_0 = arith.constant 0 : i32
    %c0_i32_1 = arith.constant 0 : i32
    return %c0_i32, %c0_i32_0 : i32, i32
  }
  func.func @transform_5(%arg0: i32) -> (i32, i32) {
    %c0_i32 = arith.constant 0 : i32
    %c0_i32_0 = arith.constant 0 : i32
    %c0_i32_1 = arith.constant 0 : i32
    return %c0_i32, %c0_i32_0 : i32, i32
  }
  func.func @transform_6(%arg0: i32) -> (i32, i32) {
    %c0_i32 = arith.constant 0 : i32
    %c0_i32_0 = arith.constant 0 : i32
    %c0_i32_1 = arith.constant 0 : i32
    return %c0_i32, %c0_i32_0 : i32, i32
  }
  func.func @transform_7(%arg0: i32) -> (i32, i32) {
    %c0_i32 = arith.constant 0 : i32
    %c0_i32_0 = arith.constant 0 : i32
    return %arg0, %c0_i32 : i32, i32
  }
}

</mosaic_0001>

<llo_original>
// kernel: tpu_custom_call.1
$region0: #{tpu_custom_call.1}
  #allocation0 [shape = 'u32[]', space=smem, size = 0x4, offset = 0x4, fixed_abs, tag = 'smem constant byte address 0x4 - core index']
  #allocation1 [shape = 'u32[144,128]{1,0:T(1,128)}', space=vmem, size = 0x12000, scoped, tag = 'internal scratch']
  %s0 = inlined_call_operand.hbm [shape: bf16[8,128], index: 0, kind: input, shape index: {}]
  %s1 = inlined_call_operand.hbm [shape: bf16[128,128], index: 1, kind: input, shape index: {}]
  %s2 = inlined_call_operand.hbm [shape: f32[1,128], index: 2, kind: input, shape index: {}]
  %s3 = inlined_call_operand.hbm [shape: bf16[128,128], index: 3, kind: input, shape index: {}]
  %s4 = inlined_call_operand.hbm [shape: f32[1,128], index: 4, kind: input, shape index: {}]
  %s5 = inlined_call_operand.hbm [shape: bf16[128,128], index: 5, kind: input, shape index: {}]
  %s6 = inlined_call_operand.hbm [shape: f32[1,128], index: 6, kind: input, shape index: {}]
  %s7 = inlined_call_operand.hbm [shape: f32[8,128], index: 7, kind: output, shape index: {}]
  %s8 = sld [smem:[#allocation0]]
  $region66: #{tpu_custom_call.1} parent=0
    _
  %s10 = ssub.s32 1, %s8
  %s11 = scalar_select 0, %s10, %s8
  $region1: #{tpu_custom_call.1} parent=0
    #allocation2 [shape = 'u8[2048]{0}', space=vmem, size = 0x800, scoped, tag = 'input window, operand 0, single buffered']
    #allocation3 [shape = 's32[1]{0}', space=sflag, size = 0x4, scoped, tag = 'scoped memory for tpu_custom_call.1']
    #allocation4 [shape = 's32[1]{0}', space=sflag, size = 0x4, scoped, tag = 'scoped memory for tpu_custom_call.1']
    #allocation5 [shape = 'u8[32768]{0}', space=vmem, size = 0x8000, scoped, tag = 'input window, operand 1, single buffered']
    #allocation6 [shape = 's32[1]{0}', space=sflag, size = 0x4, scoped, tag = 'scoped memory for tpu_custom_call.1']
    #allocation7 [shape = 'u8[512]{0}', space=vmem, size = 0x400, scoped, tag = 'input window, operand 2, single buffered']
    #allocation8 [shape = 'u8[32768]{0}', space=vmem, size = 0x8000, scoped, tag = 'input window, operand 3, single buffered']
    #allocation9 [shape = 's32[1]{0}', space=sflag, size = 0x4, scoped, tag = 'scoped memory for tpu_custom_call.1']
    #allocation10 [shape = 'u8[512]{0}', space=vmem, size = 0x400, scoped, tag = 'input window, operand 4, single buffered']
    #allocation11 [shape = 'u8[32768]{0}', space=vmem, size = 0x8000, scoped, tag = 'input window, operand 5, single buffered']
    #allocation12 [shape = 's32[1]{0}', space=sflag, size = 0x4, scoped, tag = 'scoped memory for tpu_custom_call.1']
    #allocation13 [shape = 'u8[512]{0}', space=vmem, size = 0x400, scoped, tag = 'input window, operand 6, single buffered']
    #allocation14 [shape = 'u8[4096]{0}', space=vmem, size = 0x1000, scoped, tag = 'output window, operand 0, single buffered']
    %12 = vsyncpa [#allocation3], 0
    %13 = vsyncpa [#allocation6], 0
    %14 = vsyncpa [#allocation9], 0
    %15 = vsyncpa [#allocation12], 0
    %16 = vsyncpa [#allocation4], 0
    // Predicated region
    $region2: #{tpu_custom_call.1} parent=1 // pred_check
      _
    $region3: #{tpu_custom_call.1} parent=1 // pred_check_branch
      %18 = sbr.rel (0) target = $region5
    $region4: #{tpu_custom_call.1} parent=1 // pred_region
      %s20 = ssub.s32 64, 64
      %21 = vsyncadd [#allocation3], %s20
      %s23 = sshll.u32 [#allocation2], 4
      %s24 = int_to_ptr.vmem [resolvable:$true] %s23
      %26 = dma.hbm_to_vmem [thread:$0]  %s0, 64, %s24, [#allocation3]
    $region5: #{tpu_custom_call.1} parent=1 // pred_fallthru
      _
    // Predicated region
    $region6: #{tpu_custom_call.1} parent=1 // pred_check
      _
    $region7: #{tpu_custom_call.1} parent=1 // pred_check_branch
      %28 = sbr.rel (0) target = $region9
    $region8: #{tpu_custom_call.1} parent=1 // pred_region
      %s30 = ssub.s32 1024, 1024
      %31 = vsyncadd [#allocation6], %s30
      %s32 = sshll.u32 [#allocation5], 4
      %s33 = int_to_ptr.vmem [resolvable:$true] %s32
      %38 = dma.hbm_to_vmem [thread:$0]  %s1, 1024, %s33, [#allocation6], 64, 64, 4
    $region9: #{tpu_custom_call.1} parent=1 // pred_fallthru
      _
    // Predicated region
    $region10: #{tpu_custom_call.1} parent=1 // pred_check
      _
    $region11: #{tpu_custom_call.1} parent=1 // pred_check_branch
      %40 = sbr.rel (0) target = $region13
    $region12: #{tpu_custom_call.1} parent=1 // pred_region
      %s42 = ssub.s32 16, 16
      %43 = vsyncadd [#allocation6], %s42
      %s45 = sshll.u32 [#allocation7], 4
      %s46 = int_to_ptr.vmem [resolvable:$true] %s45
      %48 = dma.hbm_to_vmem [thread:$0]  %s2, 16, %s46, [#allocation6]
    $region13: #{tpu_custom_call.1} parent=1 // pred_fallthru
      _
    // Predicated region
    $region14: #{tpu_custom_call.1} parent=1 // pred_check
      _
    $region15: #{tpu_custom_call.1} parent=1 // pred_check_branch
      %50 = sbr.rel (0) target = $region17
    $region16: #{tpu_custom_call.1} parent=1 // pred_region
      %s52 = ssub.s32 1024, 1024
      %53 = vsyncadd [#allocation9], %s52
      %s54 = sshll.u32 [#allocation8], 4
      %s55 = int_to_ptr.vmem [resolvable:$true] %s54
      %60 = dma.hbm_to_vmem [thread:$0]  %s3, 1024, %s55, [#allocation9], 64, 64, 4
    $region17: #{tpu_custom_call.1} parent=1 // pred_fallthru
      _
    // Predicated region
    $region18: #{tpu_custom_call.1} parent=1 // pred_check
      _
    $region19: #{tpu_custom_call.1} parent=1 // pred_check_branch
      %62 = sbr.rel (0) target = $region21
    $region20: #{tpu_custom_call.1} parent=1 // pred_region
      %s64 = ssub.s32 16, 16
      %65 = vsyncadd [#allocation9], %s64
      %s67 = sshll.u32 [#allocation10], 4
      %s68 = int_to_ptr.vmem [resolvable:$true] %s67
      %70 = dma.hbm_to_vmem [thread:$0]  %s4, 16, %s68, [#allocation9]
    $region21: #{tpu_custom_call.1} parent=1 // pred_fallthru
      _
    // Predicated region
    $region22: #{tpu_custom_call.1} parent=1 // pred_check
      _
    $region23: #{tpu_custom_call.1} parent=1 // pred_check_branch
      %72 = sbr.rel (0) target = $region25
    $region24: #{tpu_custom_call.1} parent=1 // pred_region
      %s74 = ssub.s32 1024, 1024
      %75 = vsyncadd [#allocation12], %s74
      %s76 = sshll.u32 [#allocation11], 4
      %s77 = int_to_ptr.vmem [resolvable:$true] %s76
      %82 = dma.hbm_to_vmem [thread:$0]  %s5, 1024, %s77, [#allocation12], 64, 64, 4
    $region25: #{tpu_custom_call.1} parent=1 // pred_fallthru
      _
    // Predicated region
    $region26: #{tpu_custom_call.1} parent=1 // pred_check
      _
    $region27: #{tpu_custom_call.1} parent=1 // pred_check_branch
      %84 = sbr.rel (0) target = $region29
    $region28: #{tpu_custom_call.1} parent=1 // pred_region
      %s86 = ssub.s32 16, 16
      %87 = vsyncadd [#allocation12], %s86
      %s89 = sshll.u32 [#allocation13], 4
      %s90 = int_to_ptr.vmem [resolvable:$true] %s89
      %92 = dma.hbm_to_vmem [thread:$0]  %s6, 16, %s90, [#allocation12]
    $region29: #{tpu_custom_call.1} parent=1 // pred_fallthru
      _
    // Predicated region
    $region30: #{tpu_custom_call.1} parent=1 // pred_check
      _
    $region31: #{tpu_custom_call.1} parent=1 // pred_check_branch
      %94 = sbr.rel (0) target = $region33
    $region32: #{tpu_custom_call.1} parent=1 // pred_region
      %95 = dma.done [#allocation3], 64
    $region33: #{tpu_custom_call.1} parent=1 // pred_fallthru
      _
    // Predicated region
    $region34: #{tpu_custom_call.1} parent=1 // pred_check
      _
    $region35: #{tpu_custom_call.1} parent=1 // pred_check_branch
      %97 = sbr.rel (0) target = $region37
    $region36: #{tpu_custom_call.1} parent=1 // pred_region
      %98 = dma.done [#allocation6], 1024
    $region37: #{tpu_custom_call.1} parent=1 // pred_fallthru
      _
    // Predicated region
    $region38: #{tpu_custom_call.1} parent=1 // pred_check
      _
    $region39: #{tpu_custom_call.1} parent=1 // pred_check_branch
      %100 = sbr.rel (0) target = $region41
    $region40: #{tpu_custom_call.1} parent=1 // pred_region
      %101 = dma.done [#allocation6], 16
    $region41: #{tpu_custom_call.1} parent=1 // pred_fallthru
      _
    // Predicated region
    $region42: #{tpu_custom_call.1} parent=1 // pred_check
      _
    $region43: #{tpu_custom_call.1} parent=1 // pred_check_branch
      %103 = sbr.rel (0) target = $region45
    $region44: #{tpu_custom_call.1} parent=1 // pred_region
      %104 = dma.done [#allocation9], 1024
    $region45: #{tpu_custom_call.1} parent=1 // pred_fallthru
      _
    // Predicated region
    $region46: #{tpu_custom_call.1} parent=1 // pred_check
      _
    $region47: #{tpu_custom_call.1} parent=1 // pred_check_branch
      %106 = sbr.rel (0) target = $region49
    $region48: #{tpu_custom_call.1} parent=1 // pred_region
      %107 = dma.done [#allocation9], 16
    $region49: #{tpu_custom_call.1} parent=1 // pred_fallthru
      _
    // Predicated region
    $region50: #{tpu_custom_call.1} parent=1 // pred_check
      _
    $region51: #{tpu_custom_call.1} parent=1 // pred_check_branch
      %109 = sbr.rel (0) target = $region53
    $region52: #{tpu_custom_call.1} parent=1 // pred_region
      %110 = dma.done [#allocation12], 1024
    $region53: #{tpu_custom_call.1} parent=1 // pred_fallthru
      _
    // Predicated region
    $region54: #{tpu_custom_call.1} parent=1 // pred_check
      _
    $region55: #{tpu_custom_call.1} parent=1 // pred_check_branch
      %112 = sbr.rel (0) target = $region57
    $region56: #{tpu_custom_call.1} parent=1 // pred_region
      %113 = dma.done [#allocation12], 16
    $region57: #{tpu_custom_call.1} parent=1 // pred_fallthru
      _
    %v115 = vld [vmem:[#allocation2] sm:$0xf]
    %v116 = vld [vmem:[#allocation5] sm:$0xf]
    %v117 = vld [vmem:[#allocation5 + $0x4] sm:$0xf]
    %v118 = vld [vmem:[#allocation5 + $0x8] sm:$0xf]
    %v119 = vld [vmem:[#allocation5 + $0xc] sm:$0xf]
    %v120 = vld [vmem:[#allocation5 + $0x10] sm:$0xf]
    %v121 = vld [vmem:[#allocation5 + $0x14] sm:$0xf]
    %v122 = vld [vmem:[#allocation5 + $0x18] sm:$0xf]
    %v123 = vld [vmem:[#allocation5 + $0x1c] sm:$0xf]
    %v124 = vld [vmem:[#allocation5 + $0x20] sm:$0xf]
    %v125 = vld [vmem:[#allocation5 + $0x24] sm:$0xf]
    %v126 = vld [vmem:[#allocation5 + $0x28] sm:$0xf]
    %v127 = vld [vmem:[#allocation5 + $0x2c] sm:$0xf]
    %v128 = vld [vmem:[#allocation5 + $0x30] sm:$0xf]
    %v129 = vld [vmem:[#allocation5 + $0x34] sm:$0xf]
    %v130 = vld [vmem:[#allocation5 + $0x38] sm:$0xf]
    %v131 = vld [vmem:[#allocation5 + $0x3c] sm:$0xf]
    %v132 = vld [vmem:[#allocation7] sm:$0x1]
    %v134 = vlaneseq
    %v135 = vshrl.u32 %v134, 7
    %v136 = vsub.s32 0, %v135
    %v137 = vrot.slane %v132, %v136
    %v155 = vunpack.c.l.b16 %v116
    %v156 = vunpack.c.l.b16 %v117
    %v157 = vunpack.c.l.b16 %v118
    %v158 = vunpack.c.l.b16 %v119
    %v159 = vunpack.c.l.b16 %v120
    %v160 = vunpack.c.l.b16 %v121
    %v161 = vunpack.c.l.b16 %v122
    %v162 = vunpack.c.l.b16 %v123
    %v163 = vunpack.c.l.b16 %v124
    %v164 = vunpack.c.l.b16 %v125
    %v165 = vunpack.c.l.b16 %v126
    %v166 = vunpack.c.l.b16 %v127
    %v167 = vunpack.c.l.b16 %v128
    %v168 = vunpack.c.l.b16 %v129
    %v169 = vunpack.c.l.b16 %v130
    %v170 = vunpack.c.l.b16 %v131
    %v171 = vpack.c.b16 %v156, %v155
    %v172 = vpack.c.b16 %v158, %v157
    %v173 = vpack.c.b16 %v160, %v159
    %v174 = vpack.c.b16 %v162, %v161
    %v175 = vpack.c.b16 %v164, %v163
    %v176 = vpack.c.b16 %v166, %v165
    %v177 = vpack.c.b16 %v168, %v167
    %v178 = vpack.c.b16 %v170, %v169
    %187 = vmatprep.subr.bf16.mxu0 0
    %188 = vmatpush1.bf16.msra.mxu0 %v171
    %189 = vmatprep.subr.bf16.mxu0 0
    %190 = vmatpush1.bf16.msra.mxu0 %v172
    %191 = vmatprep.subr.bf16.mxu0 0
    %192 = vmatpush1.bf16.msra.mxu0 %v173
    %193 = vmatprep.subr.bf16.mxu0 0
    %194 = vmatpush1.bf16.msra.mxu0 %v174
    %195 = vmatprep.subr.bf16.mxu0 0
    %196 = vmatpush1.bf16.msra.mxu0 %v175
    %197 = vmatprep.subr.bf16.mxu0 0
    %198 = vmatpush1.bf16.msra.mxu0 %v176
    %199 = vmatprep.subr.bf16.mxu0 0
    %200 = vmatpush1.bf16.msra.mxu0 %v177
    %201 = vmatprep.subr.bf16.mxu0 0
    %202 = vmatpush1.bf16.msra.mxu0 %v178
    %203 = vmatprep.subr.bf16.mxu0 0
    %204 = vmatpush1.bf16.msra.mxu0 0
    %205 = vmatprep.subr.bf16.mxu0 0
    %206 = vmatpush1.bf16.msra.mxu0 0
    %207 = vmatprep.subr.bf16.mxu0 0
    %208 = vmatpush1.bf16.msra.mxu0 0
    %209 = vmatprep.subr.bf16.mxu0 0
    %210 = vmatpush1.bf16.msra.mxu0 0
    %211 = vmatprep.subr.bf16.mxu0 0
    %212 = vmatpush1.bf16.msra.mxu0 0
    %213 = vmatprep.subr.bf16.mxu0 0
    %214 = vmatpush1.bf16.msra.mxu0 0
    %215 = vmatprep.subr.bf16.mxu0 0
    %216 = vmatpush1.bf16.msra.mxu0 0
    %217 = vmatprep.subr.bf16.mxu0 0
    %218 = vmatpush1.bf16.msra.mxu0 0
    %219 = vmatprep.mubr.bf16.mxu0 0
    %220 = vmatmul.mubr.bf16.gmra.mrb[0].mxu0 %v115
    %v221 = vpop.f32.mrb[0].mxu0
    %v222 = vadd.f32 %v137, %v221
    %v223 = vpop.f32.mrb[0].mxu0
    %v224 = vpop.f32.mrb[0].mxu0
    %v225 = vpop.f32.mrb[0].mxu0
    %226 = vdwg.mxu0
    %v227 = vmax.f32 %v222, 0.0
    %v228 = vpack.c.bf16 %v227, %v227
    %v229 = vld [vmem:[#allocation8] sm:$0xf]
    %v230 = vld [vmem:[#allocation8 + $0x4] sm:$0xf]
    %v231 = vld [vmem:[#allocation8 + $0x8] sm:$0xf]
    %v232 = vld [vmem:[#allocation8 + $0xc] sm:$0xf]
    %v233 = vld [vmem:[#allocation8 + $0x10] sm:$0xf]
    %v234 = vld [vmem:[#allocation8 + $0x14] sm:$0xf]
    %v235 = vld [vmem:[#allocation8 + $0x18] sm:$0xf]
    %v236 = vld [vmem:[#allocation8 + $0x1c] sm:$0xf]
    %v237 = vld [vmem:[#allocation8 + $0x20] sm:$0xf]
    %v238 = vld [vmem:[#allocation8 + $0x24] sm:$0xf]
    %v239 = vld [vmem:[#allocation8 + $0x28] sm:$0xf]
    %v240 = vld [vmem:[#allocation8 + $0x2c] sm:$0xf]
    %v241 = vld [vmem:[#allocation8 + $0x30] sm:$0xf]
    %v242 = vld [vmem:[#allocation8 + $0x34] sm:$0xf]
    %v243 = vld [vmem:[#allocation8 + $0x38] sm:$0xf]
    %v244 = vld [vmem:[#allocation8 + $0x3c] sm:$0xf]
    %v245 = vld [vmem:[#allocation10] sm:$0x1]
    %v247 = vlaneseq
    %v248 = vshrl.u32 %v247, 7
    %v249 = vsub.s32 0, %v248
    %v250 = vrot.slane %v245, %v249
    %v268 = vunpack.c.l.b16 %v229
    %v269 = vunpack.c.l.b16 %v230
    %v270 = vunpack.c.l.b16 %v231
    %v271 = vunpack.c.l.b16 %v232
    %v272 = vunpack.c.l.b16 %v233
    %v273 = vunpack.c.l.b16 %v234
    %v274 = vunpack.c.l.b16 %v235
    %v275 = vunpack.c.l.b16 %v236
    %v276 = vunpack.c.l.b16 %v237
    %v277 = vunpack.c.l.b16 %v238
    %v278 = vunpack.c.l.b16 %v239
    %v279 = vunpack.c.l.b16 %v240
    %v280 = vunpack.c.l.b16 %v241
    %v281 = vunpack.c.l.b16 %v242
    %v282 = vunpack.c.l.b16 %v243
    %v283 = vunpack.c.l.b16 %v244
    %v284 = vpack.c.b16 %v269, %v268
    %v285 = vpack.c.b16 %v271, %v270
    %v286 = vpack.c.b16 %v273, %v272
    %v287 = vpack.c.b16 %v275, %v274
    %v288 = vpack.c.b16 %v277, %v276
    %v289 = vpack.c.b16 %v279, %v278
    %v290 = vpack.c.b16 %v281, %v280
    %v291 = vpack.c.b16 %v283, %v282
    %300 = vmatprep.subr.bf16.mxu0 0
    %301 = vmatpush1.bf16.msra.mxu0 %v284
    %302 = vmatprep.subr.bf16.mxu0 0
    %303 = vmatpush1.bf16.msra.mxu0 %v285
    %304 = vmatprep.subr.bf16.mxu0 0
    %305 = vmatpush1.bf16.msra.mxu0 %v286
    %306 = vmatprep.subr.bf16.mxu0 0
    %307 = vmatpush1.bf16.msra.mxu0 %v287
    %308 = vmatprep.subr.bf16.mxu0 0
    %309 = vmatpush1.bf16.msra.mxu0 %v288
    %310 = vmatprep.subr.bf16.mxu0 0
    %311 = vmatpush1.bf16.msra.mxu0 %v289
    %312 = vmatprep.subr.bf16.mxu0 0
    %313 = vmatpush1.bf16.msra.mxu0 %v290
    %314 = vmatprep.subr.bf16.mxu0 0
    %315 = vmatpush1.bf16.msra.mxu0 %v291
    %316 = vmatprep.subr.bf16.mxu0 0
    %317 = vmatpush1.bf16.msra.mxu0 0
    %318 = vmatprep.subr.bf16.mxu0 0
    %319 = vmatpush1.bf16.msra.mxu0 0
    %320 = vmatprep.subr.bf16.mxu0 0
    %321 = vmatpush1.bf16.msra.mxu0 0
    %322 = vmatprep.subr.bf16.mxu0 0
    %323 = vmatpush1.bf16.msra.mxu0 0
    %324 = vmatprep.subr.bf16.mxu0 0
    %325 = vmatpush1.bf16.msra.mxu0 0
    %326 = vmatprep.subr.bf16.mxu0 0
    %327 = vmatpush1.bf16.msra.mxu0 0
    %328 = vmatprep.subr.bf16.mxu0 0
    %329 = vmatpush1.bf16.msra.mxu0 0
    %330 = vmatprep.subr.bf16.mxu0 0
    %331 = vmatpush1.bf16.msra.mxu0 0
    %332 = vmatprep.mubr.bf16.mxu0 0
    %333 = vmatmul.mubr.bf16.gmra.mrb[0].mxu0 %v228
    %v334 = vpop.f32.mrb[0].mxu0
    %v335 = vadd.f32 %v250, %v334
    %v336 = vpop.f32.mrb[0].mxu0
    %v337 = vpop.f32.mrb[0].mxu0
    %v338 = vpop.f32.mrb[0].mxu0
    %339 = vdwg.mxu0
    %v340 = vmax.f32 %v335, 0.0
    %v341 = vpack.c.bf16 %v340, %v340
    %v342 = vld [vmem:[#allocation11] sm:$0xf]
    %v343 = vld [vmem:[#allocation11 + $0x4] sm:$0xf]
    %v344 = vld [vmem:[#allocation11 + $0x8] sm:$0xf]
    %v345 = vld [vmem:[#allocation11 + $0xc] sm:$0xf]
    %v346 = vld [vmem:[#allocation11 + $0x10] sm:$0xf]
    %v347 = vld [vmem:[#allocation11 + $0x14] sm:$0xf]
    %v348 = vld [vmem:[#allocation11 + $0x18] sm:$0xf]
    %v349 = vld [vmem:[#allocation11 + $0x1c] sm:$0xf]
    %v350 = vld [vmem:[#allocation11 + $0x20] sm:$0xf]
    %v351 = vld [vmem:[#allocation11 + $0x24] sm:$0xf]
    %v352 = vld [vmem:[#allocation11 + $0x28] sm:$0xf]
    %v353 = vld [vmem:[#allocation11 + $0x2c] sm:$0xf]
    %v354 = vld [vmem:[#allocation11 + $0x30] sm:$0xf]
    %v355 = vld [vmem:[#allocation11 + $0x34] sm:$0xf]
    %v356 = vld [vmem:[#allocation11 + $0x38] sm:$0xf]
    %v357 = vld [vmem:[#allocation11 + $0x3c] sm:$0xf]
    %v358 = vld [vmem:[#allocation13] sm:$0x1]
    %v360 = vlaneseq
    %v361 = vshrl.u32 %v360, 7
    %v362 = vsub.s32 0, %v361
    %v363 = vrot.slane %v358, %v362
    %v381 = vunpack.c.l.b16 %v342
    %v382 = vunpack.c.l.b16 %v343
    %v383 = vunpack.c.l.b16 %v344
    %v384 = vunpack.c.l.b16 %v345
    %v385 = vunpack.c.l.b16 %v346
    %v386 = vunpack.c.l.b16 %v347
    %v387 = vunpack.c.l.b16 %v348
    %v388 = vunpack.c.l.b16 %v349
    %v389 = vunpack.c.l.b16 %v350
    %v390 = vunpack.c.l.b16 %v351
    %v391 = vunpack.c.l.b16 %v352
    %v392 = vunpack.c.l.b16 %v353
    %v393 = vunpack.c.l.b16 %v354
    %v394 = vunpack.c.l.b16 %v355
    %v395 = vunpack.c.l.b16 %v356
    %v396 = vunpack.c.l.b16 %v357
    %v397 = vpack.c.b16 %v382, %v381
    %v398 = vpack.c.b16 %v384, %v383
    %v399 = vpack.c.b16 %v386, %v385
    %v400 = vpack.c.b16 %v388, %v387
    %v401 = vpack.c.b16 %v390, %v389
    %v402 = vpack.c.b16 %v392, %v391
    %v403 = vpack.c.b16 %v394, %v393
    %v404 = vpack.c.b16 %v396, %v395
    %413 = vmatprep.subr.bf16.mxu0 0
    %414 = vmatpush1.bf16.msra.mxu0 %v397
    %415 = vmatprep.subr.bf16.mxu0 0
    %416 = vmatpush1.bf16.msra.mxu0 %v398
    %417 = vmatprep.subr.bf16.mxu0 0
    %418 = vmatpush1.bf16.msra.mxu0 %v399
    %419 = vmatprep.subr.bf16.mxu0 0
    %420 = vmatpush1.bf16.msra.mxu0 %v400
    %421 = vmatprep.subr.bf16.mxu0 0
    %422 = vmatpush1.bf16.msra.mxu0 %v401
    %423 = vmatprep.subr.bf16.mxu0 0
    %424 = vmatpush1.bf16.msra.mxu0 %v402
    %425 = vmatprep.subr.bf16.mxu0 0
    %426 = vmatpush1.bf16.msra.mxu0 %v403
    %427 = vmatprep.subr.bf16.mxu0 0
    %428 = vmatpush1.bf16.msra.mxu0 %v404
    %429 = vmatprep.subr.bf16.mxu0 0
    %430 = vmatpush1.bf16.msra.mxu0 0
    %431 = vmatprep.subr.bf16.mxu0 0
    %432 = vmatpush1.bf16.msra.mxu0 0
    %433 = vmatprep.subr.bf16.mxu0 0
    %434 = vmatpush1.bf16.msra.mxu0 0
    %435 = vmatprep.subr.bf16.mxu0 0
    %436 = vmatpush1.bf16.msra.mxu0 0
    %437 = vmatprep.subr.bf16.mxu0 0
    %438 = vmatpush1.bf16.msra.mxu0 0
    %439 = vmatprep.subr.bf16.mxu0 0
    %440 = vmatpush1.bf16.msra.mxu0 0
    %441 = vmatprep.subr.bf16.mxu0 0
    %442 = vmatpush1.bf16.msra.mxu0 0
    %443 = vmatprep.subr.bf16.mxu0 0
    %444 = vmatpush1.bf16.msra.mxu0 0
    %445 = vmatprep.mubr.bf16.mxu0 0
    %446 = vmatmul.mubr.bf16.gmra.mrb[0].mxu0 %v341
    %v447 = vpop.f32.mrb[0].mxu0
    %v448 = vadd.f32 %v363, %v447
    %v449 = vpop.f32.mrb[0].mxu0
    %v450 = vpop.f32.mrb[0].mxu0
    %v451 = vpop.f32.mrb[0].mxu0
    %452 = vdwg.mxu0
    %453 = vst [vmem:[#allocation14] sm:$0xff] %v448
    // Predicated region
    $region58: #{tpu_custom_call.1} parent=1 // pred_check
      _
    $region59: #{tpu_custom_call.1} parent=1 // pred_check_branch
      %455 = sbr.rel (0) target = $region61
    $region60: #{tpu_custom_call.1} parent=1 // pred_region
      %s457 = ssub.s32 128, 128
      %458 = vsyncadd [#allocation4], %s457
      %s460 = sshll.u32 [#allocation14], 4
      %s461 = int_to_ptr.vmem [resolvable:$true] %s460
      %463 = dma.vmem_to_hbm [thread:$0]  %s461, 128, %s7, [#allocation4]
    $region61: #{tpu_custom_call.1} parent=1 // pred_fallthru
      _
    // Predicated region
    $region62: #{tpu_custom_call.1} parent=1 // pred_check
      _
    $region63: #{tpu_custom_call.1} parent=1 // pred_check_branch
      %465 = sbr.rel (0) target = $region65
    $region64: #{tpu_custom_call.1} parent=1 // pred_region
      %466 = dma.done [#allocation4], 128
    $region65: #{tpu_custom_call.1} parent=1 // pred_fallthru
      _
    %467 = vsyncpa [#allocation3], 1
    %468 = vsyncpa [#allocation6], 1
    %469 = vsyncpa [#allocation9], 1
    %470 = vsyncpa [#allocation12], 1
    %471 = vsyncpa [#allocation4], 1

</llo_original>
